<compile_context>
chip_gen: v7x
topology: tpu7x:2x2x1
jax: 0.10.0
libtpu: 0.0.40
codegen_flags: <defaults>
</compile_context>

<pallas_src>
import jax
import jax.numpy as jnp
from jax.experimental import pallas as pl
from jax.experimental.pallas import tpu as pltpu

# small, forward-consistent hyperparameters
OUTPUT_DIM = 64   # V (vocab size)
EMB_DIM    = 32   # E
HIDDEN_DIM = 32   # H
SEQ_LEN    = 8    # S (encoder sequence length)
N_LAYERS   = 1    # single-layer LSTM


def _bahdanau_step_kernel(
    tok_ref,                       # SMEM (T,) int32 scalar prefetch (consumed by index_maps)
    emb_row_ref,                   # (1, 1, E) gathered embedding row for this step
    h0_ref, c0_ref,                # (1, H), (1, H) initial LSTM state
    enc_ref,                       # (S, H) encoder outputs (resident)
    wh_ref, we_ref,                # (H, H), (H, H)   fc_hidden^T, fc_encoder^T
    v_ref,                         # (1, H)           attention 'weight' vector
    wih_e_ref, wih_c_ref,          # (E, 4H), (H, 4H) W_ih^T split (emb part / ctx part)
    whh_ref, b_ref,                # (H, 4H), (1, 4H) W_hh^T, (b_ih + b_hh)
    wc_ref, bc_ref,                # (H, V), (1, V)   classifier
    out_ref,                       # (1, 1, PACK) packed per-step output slab
    h_scr, c_scr,                  # VMEM (1, H) carried LSTM state
):
    del tok_ref  # token id is only used by the embedding index_map

    H = h0_ref.shape[1]
    S = enc_ref.shape[0]
    V = wc_ref.shape[1]

    step = pl.program_id(0)

    @pl.when(step == 0)
    def _():
        h_scr[...] = h0_ref[...]
        c_scr[...] = c0_ref[...]

    h = h_scr[...]                                                   # (1, H)
    c = c_scr[...]                                                   # (1, H)
    emb = emb_row_ref[0]                                             # (1, E)  (dropout p=0)
    enc = enc_ref[...]                                               # (S, H)

    # ---- alignment scores: tanh(h@Wh + enc@We) contracted with v -> (1, S) row ----
    hp = jnp.dot(h, wh_ref[...], preferred_element_type=jnp.float32)     # (1, H)
    ep = jnp.dot(enc, we_ref[...], preferred_element_type=jnp.float32)   # (S, H)
    t = jnp.tanh(hp + ep)                                                # (S, H)
    score = jax.lax.dot_general(                                         # (1, S) on the MXU
        v_ref[...], t, (((1,), (1,)), ((), ())),
        preferred_element_type=jnp.float32)

    # ---- softmax over the sequence (lane) axis ----
    m = jnp.max(score, axis=1, keepdims=True)
    e = jnp.exp(score - m)
    attn = e / jnp.sum(e, axis=1, keepdims=True)                         # (1, S)

    # ---- context vector: (1,S) @ (S,H) on the MXU ----
    ctx = jnp.dot(attn, enc, preferred_element_type=jnp.float32)         # (1, H)

    # ---- single LSTM step; concat([emb, ctx]) replaced by split W_ih dots ----
    gates = (jnp.dot(emb, wih_e_ref[...], preferred_element_type=jnp.float32)
             + jnp.dot(ctx, wih_c_ref[...], preferred_element_type=jnp.float32)
             + jnp.dot(h, whh_ref[...], preferred_element_type=jnp.float32)
             + b_ref[...])                                               # (1, 4H)
    i_g = jax.nn.sigmoid(gates[:, 0:H])
    f_g = jax.nn.sigmoid(gates[:, H:2 * H])
    g_g = jnp.tanh(gates[:, 2 * H:3 * H])
    o_g = jax.nn.sigmoid(gates[:, 3 * H:4 * H])
    c_new = f_g * c + i_g * g_g
    h_new = o_g * jnp.tanh(c_new)
    h_scr[...] = h_new
    c_scr[...] = c_new

    # ---- classifier + log_softmax over the vocab ----
    logits = jnp.dot(h_new, wc_ref[...], preferred_element_type=jnp.float32) + bc_ref[...]
    lm = jnp.max(logits, axis=1, keepdims=True)
    z = logits - lm
    logp = z - jnp.log(jnp.sum(jnp.exp(z), axis=1, keepdims=True))       # (1, V)

    # ---- pack everything into one lane-dense slab: [logp | h | c | attn | pad] ----
    off_h = V
    off_c = V + H
    off_a = V + 2 * H
    out_ref[...] = jnp.zeros_like(out_ref)
    out_ref[:, :, 0:V] = logp[None]
    out_ref[:, :, off_h:off_h + H] = h_new[None]
    out_ref[:, :, off_c:off_c + H] = c_new[None]
    out_ref[:, :, off_a:off_a + S] = attn[None]


def bahdanau_decoder_steps(params, tokens, hidden, encoder_outputs):
    """Run T teacher-forced decode steps in a single fused pallas_call.

    tokens: (T,) int32; hidden: ((1,1,H),(1,1,H)); encoder_outputs: (S,H).
    Returns: logp (T,V), final hidden ((1,1,H),(1,1,H)), attention (T,S).
    """
    h0, c0 = hidden
    h = h0[0].astype(jnp.float32)                 # (1, H)
    c = c0[0].astype(jnp.float32)                 # (1, H)
    V, E = params["embedding"].shape
    H = h.shape[1]
    S = encoder_outputs.shape[0]
    T = int(tokens.shape[0])

    PACK = 128 * pl.cdiv(V + 2 * H + S, 128)      # lane-dense output width (256 here)

    # bounds-safe gather (clamp token ids) + reshape table for leading-dim row gather
    tokens = jnp.clip(tokens.astype(jnp.int32), 0, V - 1)
    emb3 = params["embedding"].reshape(V, 1, E)
    wih_e = params["wih_t"][:E]                   # (E, 4H)
    wih_c = params["wih_t"][E:]                   # (H, 4H)

    def resident(shape):
        # full-array block, constant block index -> stays in VMEM across all steps
        return pl.BlockSpec(shape, lambda i, tok: tuple(0 for _ in shape))

    in_specs = [
        pl.BlockSpec((1, 1, E), lambda i, tok: (tok[i], 0, 0)),   # embedding row gather
        resident((1, H)), resident((1, H)),                       # h0, c0
        resident((S, H)),                                         # encoder outputs
        resident((H, H)), resident((H, H)),                       # Wh^T, We^T
        resident((1, H)),                                         # v
        resident((E, 4 * H)), resident((H, 4 * H)),               # W_ih^T split
        resident((H, 4 * H)),                                     # W_hh^T
        resident((1, 4 * H)),                                     # lstm bias
        resident((H, V)), resident((1, V)),                       # classifier
    ]
    out_specs = pl.BlockSpec((1, 1, PACK), lambda i, tok: (i, 0, 0))
    out_shape = jax.ShapeDtypeStruct((T, 1, PACK), jnp.float32)

    packed = pl.pallas_call(
        _bahdanau_step_kernel,
        out_shape=out_shape,
        grid_spec=pltpu.PrefetchScalarGridSpec(
            num_scalar_prefetch=1,
            grid=(T,),
            in_specs=in_specs,
            out_specs=out_specs,
            scratch_shapes=[pltpu.VMEM((1, H), jnp.float32),
                            pltpu.VMEM((1, H), jnp.float32)],
        ),
        compiler_params=pltpu.CompilerParams(
            dimension_semantics=("arbitrary",)),   # sequential: h/c carried in VMEM scratch
    )(
        tokens,
        emb3, h, c, encoder_outputs,
        params["wh_t"], params["we_t"], params["v"],
        wih_e, wih_c, params["whh_t"], params["b"],
        params["wc_t"], params["bc"],
    )

    slab = packed[:, 0, :]                                  # (T, PACK)
    logp = slab[:, 0:V]                                     # (T, V)
    h_T = slab[T - 1:T, V:V + H]                            # (1, H) final state
    c_T = slab[T - 1:T, V + H:V + 2 * H]                    # (1, H)
    attn = slab[:, V + 2 * H:V + 2 * H + S]                 # (T, S)
    return logp, (h_T[None], c_T[None]), attn


def bahdanau_decoder(params, inputs, hidden, encoder_outputs):
    """Single decode step matching the torch module's forward signature/returns."""
    tokens = jnp.asarray(inputs, jnp.int32).reshape(-1)               # (1,)
    logp, hidden_out, attn = bahdanau_decoder_steps(params, tokens, hidden, encoder_outputs)
    S = encoder_outputs.shape[0]
    attention_weight = attn[0].reshape(1, S, 1)                       # (1, S, 1) like torch
    return logp, hidden_out, attention_weight


def init_params(key, V, E, H):
    ks = jax.random.split(key, 10)
    s = 0.1
    return {
        "embedding": s * jax.random.normal(ks[0], (V, E), jnp.float32),
        # nn.Linear stores W as (out, in); we pre-transpose to (in, out).
        "wh_t": s * jax.random.normal(ks[1], (H, H), jnp.float32),
        "we_t": s * jax.random.normal(ks[2], (H, H), jnp.float32),
        "v":    s * jax.random.normal(ks[3], (1, H), jnp.float32),
        # LSTM: weight_ih (4H, E+H), weight_hh (4H, H) -> transposed; biases summed.
        "wih_t": s * jax.random.normal(ks[4], (E + H, 4 * H), jnp.float32),
        "whh_t": s * jax.random.normal(ks[5], (H, 4 * H), jnp.float32),
        "b":     s * jax.random.normal(ks[6], (1, 4 * H), jnp.float32),
        # classifier: (V, H) -> transposed, plus bias.
        "wc_t": s * jax.random.normal(ks[7], (H, V), jnp.float32),
        "bc":   s * jax.random.normal(ks[8], (1, V), jnp.float32),
    }


if __name__ == "__main__":
    key = jax.random.PRNGKey(0)
    kp, kh, kc, ke = jax.random.split(key, 4)

    params = init_params(kp, OUTPUT_DIM, EMB_DIM, HIDDEN_DIM)

    inputs = jnp.array([3], dtype=jnp.int32)                                  # (1,)
    h0 = 0.1 * jax.random.normal(kh, (N_LAYERS, 1, HIDDEN_DIM), jnp.float32)  # (1,1,H)
    c0 = 0.1 * jax.random.normal(kc, (N_LAYERS, 1, HIDDEN_DIM), jnp.float32)  # (1,1,H)
    encoder_outputs = 0.1 * jax.random.normal(ke, (SEQ_LEN, HIDDEN_DIM), jnp.float32)

    # Single decode step (the torch module's forward).
    out, hidden, attn = bahdanau_decoder(params, inputs, (h0, c0), encoder_outputs)
    jax.block_until_ready((out, hidden, attn))
    assert out.shape == (1, OUTPUT_DIM)
    assert hidden[0].shape == (N_LAYERS, 1, HIDDEN_DIM)
    assert hidden[1].shape == (N_LAYERS, 1, HIDDEN_DIM)
    assert attn.shape == (1, SEQ_LEN, 1)

    # Fused T-step decode (weights resident, h/c carried in VMEM) must match
    # looping the single-step call at the JAX level.
    tokens = jnp.array([3, 7, 1, 5], dtype=jnp.int32)
    logp_fused, (hT, cT), attn_fused = bahdanau_decoder_steps(
        params, tokens, (h0, c0), encoder_outputs)
    jax.block_until_ready(logp_fused)

    h_cur, c_cur = h0, c0
    logp_seq = []
    for t_idx in range(int(tokens.shape[0])):
        lp, (h_cur, c_cur), _ = bahdanau_decoder(
            params, tokens[t_idx:t_idx + 1], (h_cur, c_cur), encoder_outputs)
        logp_seq.append(lp)
    logp_seq = jnp.concatenate(logp_seq, axis=0)

    assert logp_fused.shape == (int(tokens.shape[0]), OUTPUT_DIM)
    assert attn_fused.shape == (int(tokens.shape[0]), SEQ_LEN)
    assert jnp.allclose(logp_fused, logp_seq, atol=1e-5, rtol=1e-5)
    assert jnp.allclose(hT, h_cur, atol=1e-5, rtol=1e-5)
    assert jnp.allclose(cT, c_cur, atol=1e-5, rtol=1e-5)

    print("KERNEL_OK")
</pallas_src>

<mosaic_0001>
module attributes {stable_mosaic.version = 11 : i64} {
  func.func @_bahdanau_step_kernel(%arg0: i32, %arg1: memref<1xi32, #tpu.memory_space<smem>>, %arg2: memref<1x1x32xf32, #tpu.memory_space<vmem>>, %arg3: memref<1x32xf32, #tpu.memory_space<vmem>>, %arg4: memref<1x32xf32, #tpu.memory_space<vmem>>, %arg5: memref<8x32xf32, #tpu.memory_space<vmem>>, %arg6: memref<32x32xf32, #tpu.memory_space<vmem>>, %arg7: memref<32x32xf32, #tpu.memory_space<vmem>>, %arg8: memref<1x32xf32, #tpu.memory_space<vmem>>, %arg9: memref<32x128xf32, #tpu.memory_space<vmem>>, %arg10: memref<32x128xf32, #tpu.memory_space<vmem>>, %arg11: memref<32x128xf32, #tpu.memory_space<vmem>>, %arg12: memref<1x128xf32, #tpu.memory_space<vmem>>, %arg13: memref<32x64xf32, #tpu.memory_space<vmem>>, %arg14: memref<1x64xf32, #tpu.memory_space<vmem>>, %arg15: memref<1x1x256xf32, #tpu.memory_space<vmem>>, %arg16: memref<1x32xf32, #tpu.memory_space<vmem>>, %arg17: memref<1x32xf32, #tpu.memory_space<vmem>>) attributes {dimension_semantics = [#tpu.dimension_semantics<arbitrary>], iteration_bounds = array<i64: 1>, scalar_prefetch = 1 : i64, scratch_operands = 2 : i64, tpu.core_type = #tpu.core_type<tc>, window_params = [{transform_indices = @transform_0, window_bounds = array<i64: 1, 1, 32>}, {pipeline_mode = #tpu.pipeline_mode<synchronous>, transform_indices = @transform_1, window_bounds = array<i64: 1, 32>}, {pipeline_mode = #tpu.pipeline_mode<synchronous>, transform_indices = @transform_2, window_bounds = array<i64: 1, 32>}, {pipeline_mode = #tpu.pipeline_mode<synchronous>, transform_indices = @transform_3, window_bounds = array<i64: 8, 32>}, {pipeline_mode = #tpu.pipeline_mode<synchronous>, transform_indices = @transform_4, window_bounds = array<i64: 32, 32>}, {pipeline_mode = #tpu.pipeline_mode<synchronous>, transform_indices = @transform_5, window_bounds = array<i64: 32, 32>}, {pipeline_mode = #tpu.pipeline_mode<synchronous>, transform_indices = @transform_6, window_bounds = array<i64: 1, 32>}, {pipeline_mode = #tpu.pipeline_mode<synchronous>, transform_indices = @transform_7, window_bounds = array<i64: 32, 128>}, {pipeline_mode = #tpu.pipeline_mode<synchronous>, transform_indices = @transform_8, window_bounds = array<i64: 32, 128>}, {pipeline_mode = #tpu.pipeline_mode<synchronous>, transform_indices = @transform_9, window_bounds = array<i64: 32, 128>}, {pipeline_mode = #tpu.pipeline_mode<synchronous>, transform_indices = @transform_10, window_bounds = array<i64: 1, 128>}, {pipeline_mode = #tpu.pipeline_mode<synchronous>, transform_indices = @transform_11, window_bounds = array<i64: 32, 64>}, {pipeline_mode = #tpu.pipeline_mode<synchronous>, transform_indices = @transform_12, window_bounds = array<i64: 1, 64>}, {transform_indices = @transform_13, window_bounds = array<i64: 1, 1, 256>}]} {
    %c0_i32 = arith.constant 0 : i32
    %0 = arith.cmpi eq, %arg0, %c0_i32 : i32
    %1 = arith.extui %0 : i1 to i32
    %c0_i32_0 = arith.constant 0 : i32
    %2 = arith.cmpi ne, %1, %c0_i32_0 : i32
    scf.if %2 {
      %c0_58 = arith.constant 0 : index
      %c0_59 = arith.constant 0 : index
      %88 = vector.load %arg3[%c0_58, %c0_59] : memref<1x32xf32, #tpu.memory_space<vmem>>, vector<1x32xf32>
      %c0_60 = arith.constant 0 : index
      %c0_61 = arith.constant 0 : index
      %89 = vector.load %arg16[%c0_60, %c0_61] : memref<1x32xf32, #tpu.memory_space<vmem>>, vector<1x32xf32>
      tpu.vector_store %arg16[%c0_60, %c0_61], %88 {strides = array<i32>} : memref<1x32xf32, #tpu.memory_space<vmem>>, vector<1x32xf32>,
      %c0_62 = arith.constant 0 : index
      %c0_63 = arith.constant 0 : index
      %90 = vector.load %arg4[%c0_62, %c0_63] : memref<1x32xf32, #tpu.memory_space<vmem>>, vector<1x32xf32>
      %c0_64 = arith.constant 0 : index
      %c0_65 = arith.constant 0 : index
      %91 = vector.load %arg17[%c0_64, %c0_65] : memref<1x32xf32, #tpu.memory_space<vmem>>, vector<1x32xf32>
      tpu.vector_store %arg17[%c0_64, %c0_65], %90 {strides = array<i32>} : memref<1x32xf32, #tpu.memory_space<vmem>>, vector<1x32xf32>,
    } else {
    }
    %c0 = arith.constant 0 : index
    %c0_1 = arith.constant 0 : index
    %3 = vector.load %arg16[%c0, %c0_1] : memref<1x32xf32, #tpu.memory_space<vmem>>, vector<1x32xf32>
    %c0_2 = arith.constant 0 : index
    %c0_3 = arith.constant 0 : index
    %4 = vector.load %arg17[%c0_2, %c0_3] : memref<1x32xf32, #tpu.memory_space<vmem>>, vector<1x32xf32>
    %c0_4 = arith.constant 0 : index
    %c0_5 = arith.constant 0 : index
    %c0_6 = arith.constant 0 : index
    %5 = vector.load %arg2[%c0_4, %c0_5, %c0_6] : memref<1x1x32xf32, #tpu.memory_space<vmem>>, vector<1x1x32xf32>
    %6 = vector.shape_cast %5 : vector<1x1x32xf32> to vector<1x32xf32>
    %c0_7 = arith.constant 0 : index
    %c0_8 = arith.constant 0 : index
    %7 = vector.load %arg5[%c0_7, %c0_8] : memref<8x32xf32, #tpu.memory_space<vmem>>, vector<8x32xf32>
    %c0_9 = arith.constant 0 : index
    %c0_10 = arith.constant 0 : index
    %8 = vector.load %arg6[%c0_9, %c0_10] : memref<32x32xf32, #tpu.memory_space<vmem>>, vector<32x32xf32>
    %cst = arith.constant dense<0.000000e+00> : vector<1x32xf32>
    %9 = tpu.matmul %3, %8, %cst {dimension_numbers = #tpu.dot_dimension_numbers<[1], [0], [0], [1], [0, 0, 1, 1], [], []>} : vector<1x32xf32>, vector<32x32xf32>, vector<1x32xf32> -> vector<1x32xf32>
    %c0_11 = arith.constant 0 : index
    %c0_12 = arith.constant 0 : index
    %10 = vector.load %arg7[%c0_11, %c0_12] : memref<32x32xf32, #tpu.memory_space<vmem>>, vector<32x32xf32>
    %cst_13 = arith.constant dense<0.000000e+00> : vector<8x32xf32>
    %11 = tpu.matmul %7, %10, %cst_13 {dimension_numbers = #tpu.dot_dimension_numbers<[1], [0], [0], [1], [0, 0, 1, 1], [], []>} : vector<8x32xf32>, vector<32x32xf32>, vector<8x32xf32> -> vector<8x32xf32>
    %12 = vector.broadcast %9 : vector<1x32xf32> to vector<8x32xf32>
    %13 = arith.addf %12, %11 : vector<8x32xf32>
    %14 = math.tanh %13 : vector<8x32xf32>
    %c0_14 = arith.constant 0 : index
    %c0_15 = arith.constant 0 : index
    %15 = vector.load %arg8[%c0_14, %c0_15] : memref<1x32xf32, #tpu.memory_space<vmem>>, vector<1x32xf32>
    %cst_16 = arith.constant dense<0.000000e+00> : vector<1x8xf32>
    %16 = tpu.matmul %15, %14, %cst_16 {dimension_numbers = #tpu.dot_dimension_numbers<[1], [1], [0], [0], [0, 0, 1, 0], [], []>} : vector<1x32xf32>, vector<8x32xf32>, vector<1x8xf32> -> vector<1x8xf32>
    %cst_17 = arith.constant dense<0xFF800000> : vector<1xf32>
    %17 = vector.multi_reduction <maximumf>, %16, %cst_17 [1] : vector<1x8xf32> to vector<1xf32>
    %18 = vector.shape_cast %17 : vector<1xf32> to vector<1x1xf32>
    %19 = vector.broadcast %18 : vector<1x1xf32> to vector<1x8xf32>
    %20 = arith.subf %16, %19 : vector<1x8xf32>
    %21 = math.exp %20 : vector<1x8xf32>
    %cst_18 = arith.constant dense<0.000000e+00> : vector<1xf32>
    %22 = vector.multi_reduction <add>, %21, %cst_18 [1] : vector<1x8xf32> to vector<1xf32>
    %23 = vector.shape_cast %22 : vector<1xf32> to vector<1x1xf32>
    %24 = vector.broadcast %23 : vector<1x1xf32> to vector<1x8xf32>
    %25 = arith.divf %21, %24 : vector<1x8xf32>
    %cst_19 = arith.constant dense<0.000000e+00> : vector<1x32xf32>
    %26 = tpu.matmul %25, %7, %cst_19 {dimension_numbers = #tpu.dot_dimension_numbers<[1], [0], [0], [1], [0, 0, 1, 1], [], []>} : vector<1x8xf32>, vector<8x32xf32>, vector<1x32xf32> -> vector<1x32xf32>
    %c0_20 = arith.constant 0 : index
    %c0_21 = arith.constant 0 : index
    %27 = vector.load %arg9[%c0_20, %c0_21] : memref<32x128xf32, #tpu.memory_space<vmem>>, vector<32x128xf32>
    %cst_22 = arith.constant dense<0.000000e+00> : vector<1x128xf32>
    %28 = tpu.matmul %6, %27, %cst_22 {dimension_numbers = #tpu.dot_dimension_numbers<[1], [0], [0], [1], [0, 0, 1, 1], [], []>} : vector<1x32xf32>, vector<32x128xf32>, vector<1x128xf32> -> vector<1x128xf32>
    %c0_23 = arith.constant 0 : index
    %c0_24 = arith.constant 0 : index
    %29 = vector.load %arg10[%c0_23, %c0_24] : memref<32x128xf32, #tpu.memory_space<vmem>>, vector<32x128xf32>
    %cst_25 = arith.constant dense<0.000000e+00> : vector<1x128xf32>
    %30 = tpu.matmul %26, %29, %cst_25 {dimension_numbers = #tpu.dot_dimension_numbers<[1], [0], [0], [1], [0, 0, 1, 1], [], []>} : vector<1x32xf32>, vector<32x128xf32>, vector<1x128xf32> -> vector<1x128xf32>
    %31 = arith.addf %28, %30 : vector<1x128xf32>
    %c0_26 = arith.constant 0 : index
    %c0_27 = arith.constant 0 : index
    %32 = vector.load %arg11[%c0_26, %c0_27] : memref<32x128xf32, #tpu.memory_space<vmem>>, vector<32x128xf32>
    %cst_28 = arith.constant dense<0.000000e+00> : vector<1x128xf32>
    %33 = tpu.matmul %3, %32, %cst_28 {dimension_numbers = #tpu.dot_dimension_numbers<[1], [0], [0], [1], [0, 0, 1, 1], [], []>} : vector<1x32xf32>, vector<32x128xf32>, vector<1x128xf32> -> vector<1x128xf32>
    %34 = arith.addf %31, %33 : vector<1x128xf32>
    %c0_29 = arith.constant 0 : index
    %c0_30 = arith.constant 0 : index
    %35 = vector.load %arg12[%c0_29, %c0_30] : memref<1x128xf32, #tpu.memory_space<vmem>>, vector<1x128xf32>
    %36 = arith.addf %34, %35 : vector<1x128xf32>
    %37 = vector.extract_strided_slice %36 {offsets = [0, 0], sizes = [1, 32], strides = [1, 1]} : vector<1x128xf32> to vector<1x32xf32>
    %38 = arith.negf %37 : vector<1x32xf32>
    %39 = math.exp %38 : vector<1x32xf32>
    %cst_31 = arith.constant 1.000000e+00 : f32
    %40 = vector.broadcast %cst_31 : f32 to vector<1x32xf32>
    %41 = arith.addf %40, %39 : vector<1x32xf32>
    %42 = arith.divf %40, %41 : vector<1x32xf32>
    %43 = vector.extract_strided_slice %36 {offsets = [0, 32], sizes = [1, 32], strides = [1, 1]} : vector<1x128xf32> to vector<1x32xf32>
    %44 = arith.negf %43 : vector<1x32xf32>
    %45 = math.exp %44 : vector<1x32xf32>
    %cst_32 = arith.constant 1.000000e+00 : f32
    %46 = vector.broadcast %cst_32 : f32 to vector<1x32xf32>
    %47 = arith.addf %46, %45 : vector<1x32xf32>
    %48 = arith.divf %46, %47 : vector<1x32xf32>
    %49 = vector.extract_strided_slice %36 {offsets = [0, 64], sizes = [1, 32], strides = [1, 1]} : vector<1x128xf32> to vector<1x32xf32>
    %50 = math.tanh %49 : vector<1x32xf32>
    %51 = vector.extract_strided_slice %36 {offsets = [0, 96], sizes = [1, 32], strides = [1, 1]} : vector<1x128xf32> to vector<1x32xf32>
    %52 = arith.negf %51 : vector<1x32xf32>
    %53 = math.exp %52 : vector<1x32xf32>
    %cst_33 = arith.constant 1.000000e+00 : f32
    %54 = vector.broadcast %cst_33 : f32 to vector<1x32xf32>
    %55 = arith.addf %54, %53 : vector<1x32xf32>
    %56 = arith.divf %54, %55 : vector<1x32xf32>
    %57 = arith.mulf %48, %4 : vector<1x32xf32>
    %58 = arith.mulf %42, %50 : vector<1x32xf32>
    %59 = arith.addf %57, %58 : vector<1x32xf32>
    %60 = math.tanh %59 : vector<1x32xf32>
    %61 = arith.mulf %56, %60 : vector<1x32xf32>
    %c0_34 = arith.constant 0 : index
    %c0_35 = arith.constant 0 : index
    %62 = vector.load %arg16[%c0_34, %c0_35] : memref<1x32xf32, #tpu.memory_space<vmem>>, vector<1x32xf32>
    tpu.vector_store %arg16[%c0_34, %c0_35], %61 {strides = array<i32>} : memref<1x32xf32, #tpu.memory_space<vmem>>, vector<1x32xf32>,
    %c0_36 = arith.constant 0 : index
    %c0_37 = arith.constant 0 : index
    %63 = vector.load %arg17[%c0_36, %c0_37] : memref<1x32xf32, #tpu.memory_space<vmem>>, vector<1x32xf32>
    tpu.vector_store %arg17[%c0_36, %c0_37], %59 {strides = array<i32>} : memref<1x32xf32, #tpu.memory_space<vmem>>, vector<1x32xf32>,
    %c0_38 = arith.constant 0 : index
    %c0_39 = arith.constant 0 : index
    %64 = vector.load %arg13[%c0_38, %c0_39] : memref<32x64xf32, #tpu.memory_space<vmem>>, vector<32x64xf32>
    %cst_40 = arith.constant dense<0.000000e+00> : vector<1x64xf32>
    %65 = tpu.matmul %61, %64, %cst_40 {dimension_numbers = #tpu.dot_dimension_numbers<[1], [0], [0], [1], [0, 0, 1, 1], [], []>} : vector<1x32xf32>, vector<32x64xf32>, vector<1x64xf32> -> vector<1x64xf32>
    %c0_41 = arith.constant 0 : index
    %c0_42 = arith.constant 0 : index
    %66 = vector.load %arg14[%c0_41, %c0_42] : memref<1x64xf32, #tpu.memory_space<vmem>>, vector<1x64xf32>
    %67 = arith.addf %65, %66 : vector<1x64xf32>
    %cst_43 = arith.constant dense<0xFF800000> : vector<1xf32>
    %68 = vector.multi_reduction <maximumf>, %67, %cst_43 [1] : vector<1x64xf32> to vector<1xf32>
    %69 = vector.shape_cast %68 : vector<1xf32> to vector<1x1xf32>
    %70 = vector.broadcast %69 : vector<1x1xf32> to vector<1x64xf32>
    %71 = arith.subf %67, %70 : vector<1x64xf32>
    %72 = math.exp %71 : vector<1x64xf32>
    %cst_44 = arith.constant dense<0.000000e+00> : vector<1xf32>
    %73 = vector.multi_reduction <add>, %72, %cst_44 [1] : vector<1x64xf32> to vector<1xf32>
    %74 = vector.shape_cast %73 : vector<1xf32> to vector<1x1xf32>
    %75 = math.log %74 : vector<1x1xf32>
    %76 = vector.broadcast %75 : vector<1x1xf32> to vector<1x64xf32>
    %77 = arith.subf %71, %76 : vector<1x64xf32>
    %cst_45 = arith.constant 0.000000e+00 : f32
    %78 = vector.broadcast %cst_45 : f32 to vector<1x1x256xf32>
    %c0_46 = arith.constant 0 : index
    %c0_47 = arith.constant 0 : index
    %c0_48 = arith.constant 0 : index
    %79 = vector.load %arg15[%c0_46, %c0_47, %c0_48] : memref<1x1x256xf32, #tpu.memory_space<vmem>>, vector<1x1x256xf32>
    tpu.vector_store %arg15[%c0_46, %c0_47, %c0_48], %78 {strides = array<i32>} : memref<1x1x256xf32, #tpu.memory_space<vmem>>, vector<1x1x256xf32>,
    %80 = vector.shape_cast %77 : vector<1x64xf32> to vector<1x1x64xf32>
    %c0_49 = arith.constant 0 : index
    %c0_50 = arith.constant 0 : index
    %c0_51 = arith.constant 0 : index
    %81 = vector.load %arg15[%c0_49, %c0_50, %c0_51] : memref<1x1x256xf32, #tpu.memory_space<vmem>>, vector<1x1x64xf32>
    tpu.vector_store %arg15[%c0_49, %c0_50, %c0_51], %80 {strides = array<i32>} : memref<1x1x256xf32, #tpu.memory_space<vmem>>, vector<1x1x64xf32>,
    %82 = vector.shape_cast %61 : vector<1x32xf32> to vector<1x1x32xf32>
    %c0_52 = arith.constant 0 : index
    %c0_53 = arith.constant 0 : index
    %c64 = arith.constant 64 : index
    %83 = vector.load %arg15[%c0_52, %c0_53, %c64] : memref<1x1x256xf32, #tpu.memory_space<vmem>>, vector<1x1x32xf32>
    tpu.vector_store %arg15[%c0_52, %c0_53, %c64], %82 {strides = array<i32>} : memref<1x1x256xf32, #tpu.memory_space<vmem>>, vector<1x1x32xf32>,
    %84 = vector.shape_cast %59 : vector<1x32xf32> to vector<1x1x32xf32>
    %c0_54 = arith.constant 0 : index
    %c0_55 = arith.constant 0 : index
    %c96 = arith.constant 96 : index
    %85 = vector.load %arg15[%c0_54, %c0_55, %c96] : memref<1x1x256xf32, #tpu.memory_space<vmem>>, vector<1x1x32xf32>
    tpu.vector_store %arg15[%c0_54, %c0_55, %c96], %84 {strides = array<i32>} : memref<1x1x256xf32, #tpu.memory_space<vmem>>, vector<1x1x32xf32>,
    %86 = vector.shape_cast %25 : vector<1x8xf32> to vector<1x1x8xf32>
    %c0_56 = arith.constant 0 : index
    %c0_57 = arith.constant 0 : index
    %c128 = arith.constant 128 : index
    %87 = vector.load %arg15[%c0_56, %c0_57, %c128] : memref<1x1x256xf32, #tpu.memory_space<vmem>>, vector<1x1x8xf32>
    tpu.vector_store %arg15[%c0_56, %c0_57, %c128], %86 {strides = array<i32>} : memref<1x1x256xf32, #tpu.memory_space<vmem>>, vector<1x1x8xf32>,
    return
  }
  func.func @transform_0(%arg0: i32, %arg1: memref<1xi32, #tpu.memory_space<smem>>) -> (i32, i32, i32) {
    %0 = arith.index_cast %arg0 : i32 to index
    %1 = memref.load %arg1[%0] : memref<1xi32, #tpu.memory_space<smem>>
    %c0_i32 = arith.constant 0 : i32
    %c0_i32_0 = arith.constant 0 : i32
    %c0_i32_1 = arith.constant 0 : i32
    return %1, %c0_i32, %c0_i32_0 : i32, i32, i32
  }
  func.func @transform_1(%arg0: i32, %arg1: memref<1xi32, #tpu.memory_space<smem>>) -> (i32, i32) {
    %c0_i32 = arith.constant 0 : i32
    %c0_i32_0 = arith.constant 0 : i32
    %c0_i32_1 = arith.constant 0 : i32
    return %c0_i32, %c0_i32_0 : i32, i32
  }
  func.func @transform_2(%arg0: i32, %arg1: memref<1xi32, #tpu.memory_space<smem>>) -> (i32, i32) {
    %c0_i32 = arith.constant 0 : i32
    %c0_i32_0 = arith.constant 0 : i32
    %c0_i32_1 = arith.constant 0 : i32
    return %c0_i32, %c0_i32_0 : i32, i32
  }
  func.func @transform_3(%arg0: i32, %arg1: memref<1xi32, #tpu.memory_space<smem>>) -> (i32, i32) {
    %c0_i32 = arith.constant 0 : i32
    %c0_i32_0 = arith.constant 0 : i32
    %c0_i32_1 = arith.constant 0 : i32
    return %c0_i32, %c0_i32_0 : i32, i32
  }
  func.func @transform_4(%arg0: i32, %arg1: memref<1xi32, #tpu.memory_space<smem>>) -> (i32, i32) {
    %c0_i32 = arith.constant 0 : i32
    %c0_i32_0 = arith.constant 0 : i32
    %c0_i32_1 = arith.constant 0 : i32
    return %c0_i32, %c0_i32_0 : i32, i32
  }
  func.func @transform_5(%arg0: i32, %arg1: memref<1xi32, #tpu.memory_space<smem>>) -> (i32, i32) {
    %c0_i32 = arith.constant 0 : i32
    %c0_i32_0 = arith.constant 0 : i32
    %c0_i32_1 = arith.constant 0 : i32
    return %c0_i32, %c0_i32_0 : i32, i32
  }
  func.func @transform_6(%arg0: i32, %arg1: memref<1xi32, #tpu.memory_space<smem>>) -> (i32, i32) {
    %c0_i32 = arith.constant 0 : i32
    %c0_i32_0 = arith.constant 0 : i32
    %c0_i32_1 = arith.constant 0 : i32
    return %c0_i32, %c0_i32_0 : i32, i32
  }
  func.func @transform_7(%arg0: i32, %arg1: memref<1xi32, #tpu.memory_space<smem>>) -> (i32, i32) {
    %c0_i32 = arith.constant 0 : i32
    %c0_i32_0 = arith.constant 0 : i32
    %c0_i32_1 = arith.constant 0 : i32
    return %c0_i32, %c0_i32_0 : i32, i32
  }
  func.func @transform_8(%arg0: i32, %arg1: memref<1xi32, #tpu.memory_space<smem>>) -> (i32, i32) {
    %c0_i32 = arith.constant 0 : i32
    %c0_i32_0 = arith.constant 0 : i32
    %c0_i32_1 = arith.constant 0 : i32
    return %c0_i32, %c0_i32_0 : i32, i32
  }
  func.func @transform_9(%arg0: i32, %arg1: memref<1xi32, #tpu.memory_space<smem>>) -> (i32, i32) {
    %c0_i32 = arith.constant 0 : i32
    %c0_i32_0 = arith.constant 0 : i32
    %c0_i32_1 = arith.constant 0 : i32
    return %c0_i32, %c0_i32_0 : i32, i32
  }
  func.func @transform_10(%arg0: i32, %arg1: memref<1xi32, #tpu.memory_space<smem>>) -> (i32, i32) {
    %c0_i32 = arith.constant 0 : i32
    %c0_i32_0 = arith.constant 0 : i32
    %c0_i32_1 = arith.constant 0 : i32
    return %c0_i32, %c0_i32_0 : i32, i32
  }
  func.func @transform_11(%arg0: i32, %arg1: memref<1xi32, #tpu.memory_space<smem>>) -> (i32, i32) {
    %c0_i32 = arith.constant 0 : i32
    %c0_i32_0 = arith.constant 0 : i32
    %c0_i32_1 = arith.constant 0 : i32
    return %c0_i32, %c0_i32_0 : i32, i32
  }
  func.func @transform_12(%arg0: i32, %arg1: memref<1xi32, #tpu.memory_space<smem>>) -> (i32, i32) {
    %c0_i32 = arith.constant 0 : i32
    %c0_i32_0 = arith.constant 0 : i32
    %c0_i32_1 = arith.constant 0 : i32
    return %c0_i32, %c0_i32_0 : i32, i32
  }
  func.func @transform_13(%arg0: i32, %arg1: memref<1xi32, #tpu.memory_space<smem>>) -> (i32, i32, i32) {
    %c0_i32 = arith.constant 0 : i32
    %c0_i32_0 = arith.constant 0 : i32
    %c0_i32_1 = arith.constant 0 : i32
    return %arg0, %c0_i32, %c0_i32_0 : i32, i32, i32
  }
}

</mosaic_0001>

<llo_original>
// kernel: tpu_custom_call.1
$region0: #{tpu_custom_call.1}
  #allocation0 [shape = 'u32[]', space=smem, size = 0x4, offset = 0x4, fixed_abs, tag = 'smem constant byte address 0x4 - core index']
  #allocation1 [shape = 'u32[144,128]{1,0:T(1,128)}', space=vmem, size = 0x12000, scoped, tag = 'internal scratch']
  #allocation2 [shape = 'f32[1,32]{1,0:T(1,128)}', space=vmem, size = 0x200, scoped, tag = 'scratch operand']
  #allocation3 [shape = 'f32[1,32]{1,0:T(1,128)}', space=vmem, size = 0x200, scoped, tag = 'scratch operand']
  #allocation4 [shape = 's32[1]{0}', space=sflag, size = 0x4, scoped, tag = 'scoped memory for tpu_custom_call.1']
  #allocation5 [shape = 's32[1]{0:T(128)S(6)}', space=smem, size = 0x200, scoped, tag = 'prefetched SMEM operand 0']
  %s0 = inlined_call_operand.<no memory space> [shape: s32[1], index: 0, kind: input, shape index: {}]
  %s1 = inlined_call_operand.vmem [shape: f32[64,1,32], index: 1, kind: input, shape index: {}]
  %s2 = inlined_call_operand.vmem [shape: f32[1,32], index: 2, kind: input, shape index: {}]
  %s3 = inlined_call_operand.vmem [shape: f32[1,32], index: 3, kind: input, shape index: {}]
  %s4 = inlined_call_operand.hbm [shape: f32[8,32], index: 4, kind: input, shape index: {}]
  %s5 = inlined_call_operand.vmem [shape: f32[32,32], index: 5, kind: input, shape index: {}]
  %s6 = inlined_call_operand.vmem [shape: f32[32,32], index: 6, kind: input, shape index: {}]
  %s7 = inlined_call_operand.hbm [shape: f32[1,32], index: 7, kind: input, shape index: {}]
  %s8 = inlined_call_operand.vmem [shape: f32[32,128], index: 8, kind: input, shape index: {}]
  %s9 = inlined_call_operand.vmem [shape: f32[32,128], index: 9, kind: input, shape index: {}]
  %s10 = inlined_call_operand.hbm [shape: f32[32,128], index: 10, kind: input, shape index: {}]
  %s11 = inlined_call_operand.vmem [shape: f32[1,128], index: 11, kind: input, shape index: {}]
  %s12 = inlined_call_operand.hbm [shape: f32[32,64], index: 12, kind: input, shape index: {}]
  %s13 = inlined_call_operand.vmem [shape: f32[1,64], index: 13, kind: input, shape index: {}]
  %s14 = inlined_call_operand.hbm [shape: f32[1,1,256], index: 14, kind: output, shape index: {}]
  %s15 = sld [smem:[#allocation0]]
  $region82: #{tpu_custom_call.1} parent=0
    _
  %s17 = ssub.s32 1, %s15
  %s18 = scalar_select 0, %s17, %s15
  %19 = sst [smem:[#allocation5]] %s0
  $region1: #{tpu_custom_call.1} parent=0
    #allocation6 [shape = 'u8[4096]{0}', space=vmem, size = 0x1000, scoped, tag = 'input window, operand 4, single buffered']
    #allocation7 [shape = 's32[1]{0}', space=sflag, size = 0x4, scoped, tag = 'scoped memory for tpu_custom_call.1']
    #allocation8 [shape = 's32[1]{0}', space=sflag, size = 0x4, scoped, tag = 'scoped memory for tpu_custom_call.1']
    #allocation9 [shape = 'u8[512]{0}', space=vmem, size = 0x400, scoped, tag = 'input window, operand 7, single buffered']
    #allocation10 [shape = 's32[1]{0}', space=sflag, size = 0x4, scoped, tag = 'scoped memory for tpu_custom_call.1']
    #allocation11 [shape = 'u8[16384]{0}', space=vmem, size = 0x4000, scoped, tag = 'input window, operand 10, single buffered']
    #allocation12 [shape = 'u8[16384]{0}', space=vmem, size = 0x4000, scoped, tag = 'input window, operand 12, single buffered']
    #allocation13 [shape = 's32[1]{0}', space=sflag, size = 0x4, scoped, tag = 'scoped memory for tpu_custom_call.1']
    #allocation14 [shape = 'u8[1024]{0}', space=vmem, size = 0x400, scoped, tag = 'output window, operand 0, single buffered']
    %20 = vsyncpa [#allocation7], 0
    %21 = vsyncpa [#allocation10], 0
    %22 = vsyncpa [#allocation13], 0
    %23 = vsyncpa [#allocation8], 0
    // Predicated region
    $region2: #{tpu_custom_call.1} parent=1 // pred_check
      _
    $region3: #{tpu_custom_call.1} parent=1 // pred_check_branch
      %25 = sbr.rel (0) target = $region5
    $region4: #{tpu_custom_call.1} parent=1 // pred_region
      %s26 = sld [smem:[#allocation5]]
      %p27 = scmp.lt.s32.totalorder %s26, 63
      %s28 = scalar_select %p27, %s26, 63
      %s29 = scalar_lea.vmem %s1, %s28
      %s30 = sld [smem:[#allocation5]]
    $region5: #{tpu_custom_call.1} parent=1 // pred_fallthru
      _
    // Predicated region
    $region6: #{tpu_custom_call.1} parent=1 // pred_check
      _
    $region7: #{tpu_custom_call.1} parent=1 // pred_check_branch
      %32 = sbr.rel (0) target = $region9
    $region8: #{tpu_custom_call.1} parent=1 // pred_region
      _
    $region9: #{tpu_custom_call.1} parent=1 // pred_fallthru
      _
    // Predicated region
    $region10: #{tpu_custom_call.1} parent=1 // pred_check
      _
    $region11: #{tpu_custom_call.1} parent=1 // pred_check_branch
      %34 = sbr.rel (0) target = $region13
    $region12: #{tpu_custom_call.1} parent=1 // pred_region
      _
    $region13: #{tpu_custom_call.1} parent=1 // pred_fallthru
      _
    // Predicated region
    $region14: #{tpu_custom_call.1} parent=1 // pred_check
      _
    $region15: #{tpu_custom_call.1} parent=1 // pred_check_branch
      %36 = sbr.rel (0) target = $region17
    $region16: #{tpu_custom_call.1} parent=1 // pred_region
      %s38 = ssub.s32 128, 128
      %39 = vsyncadd [#allocation7], %s38
      %s41 = sshll.u32 [#allocation6], 4
      %s42 = int_to_ptr.vmem [resolvable:$true] %s41
      %44 = dma.hbm_to_vmem [thread:$0]  %s4, 128, %s42, [#allocation7]
    $region17: #{tpu_custom_call.1} parent=1 // pred_fallthru
      _
    // Predicated region
    $region18: #{tpu_custom_call.1} parent=1 // pred_check
      _
    $region19: #{tpu_custom_call.1} parent=1 // pred_check_branch
      %46 = sbr.rel (0) target = $region21
    $region20: #{tpu_custom_call.1} parent=1 // pred_region
      _
    $region21: #{tpu_custom_call.1} parent=1 // pred_fallthru
      _
    // Predicated region
    $region22: #{tpu_custom_call.1} parent=1 // pred_check
      _
    $region23: #{tpu_custom_call.1} parent=1 // pred_check_branch
      %48 = sbr.rel (0) target = $region25
    $region24: #{tpu_custom_call.1} parent=1 // pred_region
      _
    $region25: #{tpu_custom_call.1} parent=1 // pred_fallthru
      _
    // Predicated region
    $region26: #{tpu_custom_call.1} parent=1 // pred_check
      _
    $region27: #{tpu_custom_call.1} parent=1 // pred_check_branch
      %50 = sbr.rel (0) target = $region29
    $region28: #{tpu_custom_call.1} parent=1 // pred_region
      %s52 = ssub.s32 16, 16
      %53 = vsyncadd [#allocation10], %s52
      %s55 = sshll.u32 [#allocation9], 4
      %s56 = int_to_ptr.vmem [resolvable:$true] %s55
      %58 = dma.hbm_to_vmem [thread:$0]  %s7, 16, %s56, [#allocation10]
    $region29: #{tpu_custom_call.1} parent=1 // pred_fallthru
      _
    // Predicated region
    $region30: #{tpu_custom_call.1} parent=1 // pred_check
      _
    $region31: #{tpu_custom_call.1} parent=1 // pred_check_branch
      %60 = sbr.rel (0) target = $region33
    $region32: #{tpu_custom_call.1} parent=1 // pred_region
      _
    $region33: #{tpu_custom_call.1} parent=1 // pred_fallthru
      _
    // Predicated region
    $region34: #{tpu_custom_call.1} parent=1 // pred_check
      _
    $region35: #{tpu_custom_call.1} parent=1 // pred_check_branch
      %62 = sbr.rel (0) target = $region37
    $region36: #{tpu_custom_call.1} parent=1 // pred_region
      _
    $region37: #{tpu_custom_call.1} parent=1 // pred_fallthru
      _
    // Predicated region
    $region38: #{tpu_custom_call.1} parent=1 // pred_check
      _
    $region39: #{tpu_custom_call.1} parent=1 // pred_check_branch
      %64 = sbr.rel (0) target = $region41
    $region40: #{tpu_custom_call.1} parent=1 // pred_region
      %s66 = ssub.s32 512, 512
      %67 = vsyncadd [#allocation10], %s66
      %s68 = sshll.u32 [#allocation11], 4
      %s69 = int_to_ptr.vmem [resolvable:$true] %s68
      %74 = dma.hbm_to_vmem [thread:$0]  %s10, 512, %s69, [#allocation10], 128, 128, 8
    $region41: #{tpu_custom_call.1} parent=1 // pred_fallthru
      _
    // Predicated region
    $region42: #{tpu_custom_call.1} parent=1 // pred_check
      _
    $region43: #{tpu_custom_call.1} parent=1 // pred_check_branch
      %76 = sbr.rel (0) target = $region45
    $region44: #{tpu_custom_call.1} parent=1 // pred_region
      _
    $region45: #{tpu_custom_call.1} parent=1 // pred_fallthru
      _
    // Predicated region
    $region46: #{tpu_custom_call.1} parent=1 // pred_check
      _
    $region47: #{tpu_custom_call.1} parent=1 // pred_check_branch
      %78 = sbr.rel (0) target = $region49
    $region48: #{tpu_custom_call.1} parent=1 // pred_region
      %s80 = ssub.s32 512, 512
      %81 = vsyncadd [#allocation13], %s80
      %s82 = sshll.u32 [#allocation12], 4
      %s83 = int_to_ptr.vmem [resolvable:$true] %s82
      %88 = dma.hbm_to_vmem [thread:$0]  %s12, 512, %s83, [#allocation13], 128, 128, 8
    $region49: #{tpu_custom_call.1} parent=1 // pred_fallthru
      _
    // Predicated region
    $region50: #{tpu_custom_call.1} parent=1 // pred_check
      _
    $region51: #{tpu_custom_call.1} parent=1 // pred_check_branch
      %90 = sbr.rel (0) target = $region53
    $region52: #{tpu_custom_call.1} parent=1 // pred_region
      _
    $region53: #{tpu_custom_call.1} parent=1 // pred_fallthru
      _
    // Predicated region
    $region54: #{tpu_custom_call.1} parent=1 // pred_check
      _
    $region55: #{tpu_custom_call.1} parent=1 // pred_check_branch
      %92 = sbr.rel (0) target = $region57
    $region56: #{tpu_custom_call.1} parent=1 // pred_region
      %93 = dma.done [#allocation7], 128
    $region57: #{tpu_custom_call.1} parent=1 // pred_fallthru
      _
    // Predicated region
    $region58: #{tpu_custom_call.1} parent=1 // pred_check
      _
    $region59: #{tpu_custom_call.1} parent=1 // pred_check_branch
      %95 = sbr.rel (0) target = $region61
    $region60: #{tpu_custom_call.1} parent=1 // pred_region
      %96 = dma.done [#allocation10], 16
    $region61: #{tpu_custom_call.1} parent=1 // pred_fallthru
      _
    // Predicated region
    $region62: #{tpu_custom_call.1} parent=1 // pred_check
      _
    $region63: #{tpu_custom_call.1} parent=1 // pred_check_branch
      %98 = sbr.rel (0) target = $region65
    $region64: #{tpu_custom_call.1} parent=1 // pred_region
      %99 = dma.done [#allocation10], 512
    $region65: #{tpu_custom_call.1} parent=1 // pred_fallthru
      _
    // Predicated region
    $region66: #{tpu_custom_call.1} parent=1 // pred_check
      _
    $region67: #{tpu_custom_call.1} parent=1 // pred_check_branch
      %101 = sbr.rel (0) target = $region69
    $region68: #{tpu_custom_call.1} parent=1 // pred_region
      %102 = dma.done [#allocation13], 512
    $region69: #{tpu_custom_call.1} parent=1 // pred_fallthru
      _
    %s103 = sld [smem:[#allocation5]]
    %p104 = scmp.lt.s32.totalorder %s103, 63
    %s105 = scalar_select %p104, %s103, 63
    %s106 = scalar_lea.vmem %s1, %s105
    %s107 = sld [smem:[#allocation5]]
    %p108 = scmp.lt.s32.totalorder %s107, 63
    %s109 = scalar_select %p108, %s107, 63
    %s110 = scalar_lea.vmem %s1, %s109
    %s111 = sld [smem:[#allocation5]]
    %p112 = scmp.eq.s32.totalorder 0, 0
    // Predicated region
    $region70: #{tpu_custom_call.1} parent=1 // pred_check
      %p113 = pneg %p112
    $region71: #{tpu_custom_call.1} parent=1 // pred_check_branch
      %115 = sbr.rel (%p113) target = $region73
    $region72: #{tpu_custom_call.1} parent=1 // pred_region
      %v116 = vld [vmem:[%s2] sm:$0x1]
      %vm117 = vcmask 253952
      %118 = vst.msk [vmem:[#allocation2] sm:$0x1] %vm117, %v116
      %v119 = vld [vmem:[%s3] sm:$0x1]
      %120 = vst.msk [vmem:[#allocation3] sm:$0x1] %vm117, %v119
    $region73: #{tpu_custom_call.1} parent=1 // pred_fallthru
      _
    %v121 = vld [vmem:[#allocation2] sm:$0x1]
    %v122 = vld [vmem:[#allocation3] sm:$0x1]
    %v123 = vld [vmem:[%s110] sm:$0x1]
    %v124 = vld [vmem:[#allocation6] sm:$0xff]
    %v125 = vld [vmem:[%s5] sm:$0xff]
    %v126 = vld [vmem:[%s5 + $0x8] sm:$0xff]
    %v127 = vld [vmem:[%s5 + $0x10] sm:$0xff]
    %v128 = vld [vmem:[%s5 + $0x18] sm:$0xff]
    %vm129 = vcmask 261120
    %v131 = vsel %vm129, %v121, 0
    %133 = vmatprep.subr.mxu0 0.0
    %134 = vmatpush1.msra.mxu0 %v125
    %135 = vmatprep.subr.mxu0 0.0
    %136 = vmatpush1.msra.mxu0 %v126
    %137 = vmatprep.subr.mxu0 0.0
    %138 = vmatpush1.msra.mxu0 %v127
    %139 = vmatprep.subr.mxu0 0.0
    %140 = vmatpush1.msra.mxu0 %v128
    %141 = vmatprep.subr.mxu0 0.0
    %142 = vmatpush1.msra.mxu0 0.0
    %143 = vmatprep.subr.mxu0 0.0
    %144 = vmatpush1.msra.mxu0 0.0
    %145 = vmatprep.subr.mxu0 0.0
    %146 = vmatpush1.msra.mxu0 0.0
    %147 = vmatprep.subr.mxu0 0.0
    %148 = vmatpush1.msra.mxu0 0.0
    %149 = vmatprep.subr.mxu0 0.0
    %150 = vmatpush1.msra.mxu0 0.0
    %151 = vmatprep.subr.mxu0 0.0
    %152 = vmatpush1.msra.mxu0 0.0
    %153 = vmatprep.subr.mxu0 0.0
    %154 = vmatpush1.msra.mxu0 0.0
    %155 = vmatprep.subr.mxu0 0.0
    %156 = vmatpush1.msra.mxu0 0.0
    %157 = vmatprep.subr.mxu0 0.0
    %158 = vmatpush1.msra.mxu0 0.0
    %159 = vmatprep.subr.mxu0 0.0
    %160 = vmatpush1.msra.mxu0 0.0
    %161 = vmatprep.subr.mxu0 0.0
    %162 = vmatpush1.msra.mxu0 0.0
    %163 = vmatprep.subr.mxu0 0.0
    %164 = vmatpush1.msra.mxu0 0.0
    %165 = vmatprep.subr.mxu0 0.0
    %166 = vmatpush1.msra.mxu0 0.0
    %167 = vmatprep.subr.mxu0 0.0
    %168 = vmatpush1.msra.mxu0 0.0
    %169 = vmatprep.subr.mxu0 0.0
    %170 = vmatpush1.msra.mxu0 0.0
    %171 = vmatprep.subr.mxu0 0.0
    %172 = vmatpush1.msra.mxu0 0.0
    %173 = vmatprep.subr.mxu0 0.0
    %174 = vmatpush1.msra.mxu0 0.0
    %175 = vmatprep.subr.mxu0 0.0
    %176 = vmatpush1.msra.mxu0 0.0
    %177 = vmatprep.subr.mxu0 0.0
    %178 = vmatpush1.msra.mxu0 0.0
    %179 = vmatprep.subr.mxu0 0.0
    %180 = vmatpush1.msra.mxu0 0.0
    %181 = vmatprep.subr.mxu0 0.0
    %182 = vmatpush1.msra.mxu0 0.0
    %183 = vmatprep.subr.mxu0 0.0
    %184 = vmatpush1.msra.mxu0 0.0
    %185 = vmatprep.subr.mxu0 0.0
    %186 = vmatpush1.msra.mxu0 0.0
    %187 = vmatprep.subr.mxu0 0.0
    %188 = vmatpush1.msra.mxu0 0.0
    %189 = vmatprep.subr.mxu0 0.0
    %190 = vmatpush1.msra.mxu0 0.0
    %191 = vmatprep.subr.mxu0 0.0
    %192 = vmatpush1.msra.mxu0 0.0
    %193 = vmatprep.subr.mxu0 0.0
    %194 = vmatpush1.msra.mxu0 0.0
    %195 = vmatprep.subr.mxu0 0.0
    %196 = vmatpush1.msra.mxu0 0.0
    %197 = vmatprep.mubr.f32.mxu0 0.0
    %198 = vmatmul.mubr.f32.gmra.mrb[0].mxu0 %v131
    %v199 = vpop.f32.mrb[0].mxu0
    %v200 = vadd.f32 0.0, %v199
    %v201 = vpop.f32.mrb[0].mxu0
    %202 = vdwg.mxu0
    %v203 = vld [vmem:[%s6] sm:$0xff]
    %v204 = vld [vmem:[%s6 + $0x8] sm:$0xff]
    %v205 = vld [vmem:[%s6 + $0x10] sm:$0xff]
    %v206 = vld [vmem:[%s6 + $0x18] sm:$0xff]
    %v208 = vsel %vm129, %v124, 0
    %210 = vmatprep.subr.mxu0 0.0
    %211 = vmatpush1.msra.mxu0 %v203
    %212 = vmatprep.subr.mxu0 0.0
    %213 = vmatpush1.msra.mxu0 %v204
    %214 = vmatprep.subr.mxu0 0.0
    %215 = vmatpush1.msra.mxu0 %v205
    %216 = vmatprep.subr.mxu0 0.0
    %217 = vmatpush1.msra.mxu0 %v206
    %218 = vmatprep.subr.mxu0 0.0
    %219 = vmatpush1.msra.mxu0 0.0
    %220 = vmatprep.subr.mxu0 0.0
    %221 = vmatpush1.msra.mxu0 0.0
    %222 = vmatprep.subr.mxu0 0.0
    %223 = vmatpush1.msra.mxu0 0.0
    %224 = vmatprep.subr.mxu0 0.0
    %225 = vmatpush1.msra.mxu0 0.0
    %226 = vmatprep.subr.mxu0 0.0
    %227 = vmatpush1.msra.mxu0 0.0
    %228 = vmatprep.subr.mxu0 0.0
    %229 = vmatpush1.msra.mxu0 0.0
    %230 = vmatprep.subr.mxu0 0.0
    %231 = vmatpush1.msra.mxu0 0.0
    %232 = vmatprep.subr.mxu0 0.0
    %233 = vmatpush1.msra.mxu0 0.0
    %234 = vmatprep.subr.mxu0 0.0
    %235 = vmatpush1.msra.mxu0 0.0
    %236 = vmatprep.subr.mxu0 0.0
    %237 = vmatpush1.msra.mxu0 0.0
    %238 = vmatprep.subr.mxu0 0.0
    %239 = vmatpush1.msra.mxu0 0.0
    %240 = vmatprep.subr.mxu0 0.0
    %241 = vmatpush1.msra.mxu0 0.0
    %242 = vmatprep.subr.mxu0 0.0
    %243 = vmatpush1.msra.mxu0 0.0
    %244 = vmatprep.subr.mxu0 0.0
    %245 = vmatpush1.msra.mxu0 0.0
    %246 = vmatprep.subr.mxu0 0.0
    %247 = vmatpush1.msra.mxu0 0.0
    %248 = vmatprep.subr.mxu0 0.0
    %249 = vmatpush1.msra.mxu0 0.0
    %250 = vmatprep.subr.mxu0 0.0
    %251 = vmatpush1.msra.mxu0 0.0
    %252 = vmatprep.subr.mxu0 0.0
    %253 = vmatpush1.msra.mxu0 0.0
    %254 = vmatprep.subr.mxu0 0.0
    %255 = vmatpush1.msra.mxu0 0.0
    %256 = vmatprep.subr.mxu0 0.0
    %257 = vmatpush1.msra.mxu0 0.0
    %258 = vmatprep.subr.mxu0 0.0
    %259 = vmatpush1.msra.mxu0 0.0
    %260 = vmatprep.subr.mxu0 0.0
    %261 = vmatpush1.msra.mxu0 0.0
    %262 = vmatprep.subr.mxu0 0.0
    %263 = vmatpush1.msra.mxu0 0.0
    %264 = vmatprep.subr.mxu0 0.0
    %265 = vmatpush1.msra.mxu0 0.0
    %266 = vmatprep.subr.mxu0 0.0
    %267 = vmatpush1.msra.mxu0 0.0
    %268 = vmatprep.subr.mxu0 0.0
    %269 = vmatpush1.msra.mxu0 0.0
    %270 = vmatprep.subr.mxu0 0.0
    %271 = vmatpush1.msra.mxu0 0.0
    %272 = vmatprep.subr.mxu0 0.0
    %273 = vmatpush1.msra.mxu0 0.0
    %274 = vmatprep.mubr.f32.mxu0 0.0
    %275 = vmatmul.mubr.f32.gmra.mrb[0].mxu0 %v208
    %v276 = vpop.f32.mrb[0].mxu0
    %v277 = vadd.f32 0.0, %v276
    %v278 = vpop.f32.mrb[0].mxu0
    %279 = vdwg.mxu0
    %v280 = vlaneseq
    %v281 = vshrl.u32 %v280, 7
    %v282 = vsub.s32 0, %v281
    %v283 = vrot.slane %v200, %v282
    %v284 = vadd.f32 %v283, %v277
    %v285 = vtanh.pop %v284
    %v286 = vld [vmem:[#allocation9] sm:$0x1]
    %v288 = vsel %vm129, %v286, 0
    %v291 = vsel %vm129, %v285, 0
    %293 = vmatprep.subr.mxu0 0.0
    %294 = vmatpush1.xpose.msra.mxu0 %v291
    %295 = vmatprep.subr.mxu0 0.0
    %296 = vmatpush1.xpose.msra.mxu0 0.0
    %297 = vmatprep.subr.mxu0 0.0
    %298 = vmatpush1.xpose.msra.mxu0 0.0
    %299 = vmatprep.subr.mxu0 0.0
    %300 = vmatpush1.xpose.msra.mxu0 0.0
    %301 = vmatprep.subr.mxu0 0.0
    %302 = vmatpush1.xpose.msra.mxu0 0.0
    %303 = vmatprep.subr.mxu0 0.0
    %304 = vmatpush1.xpose.msra.mxu0 0.0
    %305 = vmatprep.subr.mxu0 0.0
    %306 = vmatpush1.xpose.msra.mxu0 0.0
    %307 = vmatprep.subr.mxu0 0.0
    %308 = vmatpush1.xpose.msra.mxu0 0.0
    %309 = vmatprep.subr.mxu0 0.0
    %310 = vmatpush1.xpose.msra.mxu0 0.0
    %311 = vmatprep.subr.mxu0 0.0
    %312 = vmatpush1.xpose.msra.mxu0 0.0
    %313 = vmatprep.subr.mxu0 0.0
    %314 = vmatpush1.xpose.msra.mxu0 0.0
    %315 = vmatprep.subr.mxu0 0.0
    %316 = vmatpush1.xpose.msra.mxu0 0.0
    %317 = vmatprep.subr.mxu0 0.0
    %318 = vmatpush1.xpose.msra.mxu0 0.0
    %319 = vmatprep.subr.mxu0 0.0
    %320 = vmatpush1.xpose.msra.mxu0 0.0
    %321 = vmatprep.subr.mxu0 0.0
    %322 = vmatpush1.xpose.msra.mxu0 0.0
    %323 = vmatprep.subr.mxu0 0.0
    %324 = vmatpush1.xpose.msra.mxu0 0.0
    %325 = vmatprep.subr.mxu0 0.0
    %326 = vmatpush1.xpose.msra.mxu0 0.0
    %327 = vmatprep.subr.mxu0 0.0
    %328 = vmatpush1.xpose.msra.mxu0 0.0
    %329 = vmatprep.subr.mxu0 0.0
    %330 = vmatpush1.xpose.msra.mxu0 0.0
    %331 = vmatprep.subr.mxu0 0.0
    %332 = vmatpush1.xpose.msra.mxu0 0.0
    %333 = vmatprep.subr.mxu0 0.0
    %334 = vmatpush1.xpose.msra.mxu0 0.0
    %335 = vmatprep.subr.mxu0 0.0
    %336 = vmatpush1.xpose.msra.mxu0 0.0
    %337 = vmatprep.subr.mxu0 0.0
    %338 = vmatpush1.xpose.msra.mxu0 0.0
    %339 = vmatprep.subr.mxu0 0.0
    %340 = vmatpush1.xpose.msra.mxu0 0.0
    %341 = vmatprep.subr.mxu0 0.0
    %342 = vmatpush1.xpose.msra.mxu0 0.0
    %343 = vmatprep.subr.mxu0 0.0
    %344 = vmatpush1.xpose.msra.mxu0 0.0
    %345 = vmatprep.subr.mxu0 0.0
    %346 = vmatpush1.xpose.msra.mxu0 0.0
    %347 = vmatprep.subr.mxu0 0.0
    %348 = vmatpush1.xpose.msra.mxu0 0.0
    %349 = vmatprep.subr.mxu0 0.0
    %350 = vmatpush1.xpose.msra.mxu0 0.0
    %351 = vmatprep.subr.mxu0 0.0
    %352 = vmatpush1.xpose.msra.mxu0 0.0
    %353 = vmatprep.subr.mxu0 0.0
    %354 = vmatpush1.xpose.msra.mxu0 0.0
    %355 = vmatprep.subr.mxu0 0.0
    %356 = vmatpush1.xpose.msra.mxu0 0.0
    %357 = vmatprep.mubr.f32.mxu0 0.0
    %358 = vmatmul.mubr.f32.gmra.mrb[0].mxu0 %v288
    %v359 = vpop.f32.mrb[0].mxu0
    %v360 = vadd.f32 0.0, %v359
    %v361 = vpop.f32.mrb[0].mxu0
    %362 = vdwg.mxu0
    %vm363 = vcmask 57344
    %v364 = vsel %vm363, %v360, -inf
    %365 = vmax.xlane.f32.xlu0 %v364
    %v366 = vpop.xlane.xlu0 %365
    %v367 = vsub.f32 %v360, %v366
    %v368 = vmul.f32 %v367, 1.442695
    %v369 = vpow.pop %v368
    %v370 = vsel %vm363, %v369, 0.0
    %371 = vadd.xlane.f32.xlu0 %v370
    %v372 = vpop.xlane.xlu0 %371
    %v373 = vrcp.pop %v372
    %v374 = vmul.f32 %v369, %v373
    %vm375 = vcmask 64512
    %v377 = vsel %vm375, %v374, 0
    %379 = vmatprep.subr.mxu0 0.0
    %380 = vmatpush1.msra.mxu0 %v124
    %381 = vmatprep.subr.mxu0 0.0
    %382 = vmatpush1.msra.mxu0 0.0
    %383 = vmatprep.subr.mxu0 0.0
    %384 = vmatpush1.msra.mxu0 0.0
    %385 = vmatprep.subr.mxu0 0.0
    %386 = vmatpush1.msra.mxu0 0.0
    %387 = vmatprep.subr.mxu0 0.0
    %388 = vmatpush1.msra.mxu0 0.0
    %389 = vmatprep.subr.mxu0 0.0
    %390 = vmatpush1.msra.mxu0 0.0
    %391 = vmatprep.subr.mxu0 0.0
    %392 = vmatpush1.msra.mxu0 0.0
    %393 = vmatprep.subr.mxu0 0.0
    %394 = vmatpush1.msra.mxu0 0.0
    %395 = vmatprep.subr.mxu0 0.0
    %396 = vmatpush1.msra.mxu0 0.0
    %397 = vmatprep.subr.mxu0 0.0
    %398 = vmatpush1.msra.mxu0 0.0
    %399 = vmatprep.subr.mxu0 0.0
    %400 = vmatpush1.msra.mxu0 0.0
    %401 = vmatprep.subr.mxu0 0.0
    %402 = vmatpush1.msra.mxu0 0.0
    %403 = vmatprep.subr.mxu0 0.0
    %404 = vmatpush1.msra.mxu0 0.0
    %405 = vmatprep.subr.mxu0 0.0
    %406 = vmatpush1.msra.mxu0 0.0
    %407 = vmatprep.subr.mxu0 0.0
    %408 = vmatpush1.msra.mxu0 0.0
    %409 = vmatprep.subr.mxu0 0.0
    %410 = vmatpush1.msra.mxu0 0.0
    %411 = vmatprep.subr.mxu0 0.0
    %412 = vmatpush1.msra.mxu0 0.0
    %413 = vmatprep.subr.mxu0 0.0
    %414 = vmatpush1.msra.mxu0 0.0
    %415 = vmatprep.subr.mxu0 0.0
    %416 = vmatpush1.msra.mxu0 0.0
    %417 = vmatprep.subr.mxu0 0.0
    %418 = vmatpush1.msra.mxu0 0.0
    %419 = vmatprep.subr.mxu0 0.0
    %420 = vmatpush1.msra.mxu0 0.0
    %421 = vmatprep.subr.mxu0 0.0
    %422 = vmatpush1.msra.mxu0 0.0
    %423 = vmatprep.subr.mxu0 0.0
    %424 = vmatpush1.msra.mxu0 0.0
    %425 = vmatprep.subr.mxu0 0.0
    %426 = vmatpush1.msra.mxu0 0.0
    %427 = vmatprep.subr.mxu0 0.0
    %428 = vmatpush1.msra.mxu0 0.0
    %429 = vmatprep.subr.mxu0 0.0
    %430 = vmatpush1.msra.mxu0 0.0
    %431 = vmatprep.subr.mxu0 0.0
    %432 = vmatpush1.msra.mxu0 0.0
    %433 = vmatprep.subr.mxu0 0.0
    %434 = vmatpush1.msra.mxu0 0.0
    %435 = vmatprep.subr.mxu0 0.0
    %436 = vmatpush1.msra.mxu0 0.0
    %437 = vmatprep.subr.mxu0 0.0
    %438 = vmatpush1.msra.mxu0 0.0
    %439 = vmatprep.subr.mxu0 0.0
    %440 = vmatpush1.msra.mxu0 0.0
    %441 = vmatprep.subr.mxu0 0.0
    %442 = vmatpush1.msra.mxu0 0.0
    %443 = vmatprep.mubr.f32.mxu0 0.0
    %444 = vmatmul.mubr.f32.gmra.mrb[0].mxu0 %v377
    %v445 = vpop.f32.mrb[0].mxu0
    %v446 = vadd.f32 0.0, %v445
    %v447 = vpop.f32.mrb[0].mxu0
    %448 = vdwg.mxu0
    %v449 = vld [vmem:[%s8] sm:$0xff]
    %v450 = vld [vmem:[%s8 + $0x8] sm:$0xff]
    %v451 = vld [vmem:[%s8 + $0x10] sm:$0xff]
    %v452 = vld [vmem:[%s8 + $0x18] sm:$0xff]
    %v453 = vld [vmem:[%s9] sm:$0xff]
    %v454 = vld [vmem:[%s9 + $0x8] sm:$0xff]
    %v455 = vld [vmem:[%s9 + $0x10] sm:$0xff]
    %v456 = vld [vmem:[%s9 + $0x18] sm:$0xff]
    %v458 = vsel %vm129, %v446, 0
    %460 = vmatprep.subr.mxu0 0.0
    %461 = vmatpush1.msra.mxu0 %v453
    %462 = vmatprep.subr.mxu0 0.0
    %463 = vmatpush1.msra.mxu0 %v454
    %464 = vmatprep.subr.mxu0 0.0
    %465 = vmatpush1.msra.mxu0 %v455
    %466 = vmatprep.subr.mxu0 0.0
    %467 = vmatpush1.msra.mxu0 %v456
    %468 = vmatprep.subr.mxu0 0.0
    %469 = vmatpush1.msra.mxu0 0.0
    %470 = vmatprep.subr.mxu0 0.0
    %471 = vmatpush1.msra.mxu0 0.0
    %472 = vmatprep.subr.mxu0 0.0
    %473 = vmatpush1.msra.mxu0 0.0
    %474 = vmatprep.subr.mxu0 0.0
    %475 = vmatpush1.msra.mxu0 0.0
    %476 = vmatprep.subr.mxu0 0.0
    %477 = vmatpush1.msra.mxu0 0.0
    %478 = vmatprep.subr.mxu0 0.0
    %479 = vmatpush1.msra.mxu0 0.0
    %480 = vmatprep.subr.mxu0 0.0
    %481 = vmatpush1.msra.mxu0 0.0
    %482 = vmatprep.subr.mxu0 0.0
    %483 = vmatpush1.msra.mxu0 0.0
    %484 = vmatprep.subr.mxu0 0.0
    %485 = vmatpush1.msra.mxu0 0.0
    %486 = vmatprep.subr.mxu0 0.0
    %487 = vmatpush1.msra.mxu0 0.0
    %488 = vmatprep.subr.mxu0 0.0
    %489 = vmatpush1.msra.mxu0 0.0
    %490 = vmatprep.subr.mxu0 0.0
    %491 = vmatpush1.msra.mxu0 0.0
    %492 = vmatprep.subr.mxu0 0.0
    %493 = vmatpush1.msra.mxu0 0.0
    %494 = vmatprep.subr.mxu0 0.0
    %495 = vmatpush1.msra.mxu0 0.0
    %496 = vmatprep.subr.mxu0 0.0
    %497 = vmatpush1.msra.mxu0 0.0
    %498 = vmatprep.subr.mxu0 0.0
    %499 = vmatpush1.msra.mxu0 0.0
    %500 = vmatprep.subr.mxu0 0.0
    %501 = vmatpush1.msra.mxu0 0.0
    %502 = vmatprep.subr.mxu0 0.0
    %503 = vmatpush1.msra.mxu0 0.0
    %504 = vmatprep.subr.mxu0 0.0
    %505 = vmatpush1.msra.mxu0 0.0
    %506 = vmatprep.subr.mxu0 0.0
    %507 = vmatpush1.msra.mxu0 0.0
    %508 = vmatprep.subr.mxu0 0.0
    %509 = vmatpush1.msra.mxu0 0.0
    %510 = vmatprep.subr.mxu0 0.0
    %511 = vmatpush1.msra.mxu0 0.0
    %512 = vmatprep.subr.mxu0 0.0
    %513 = vmatpush1.msra.mxu0 0.0
    %514 = vmatprep.subr.mxu0 0.0
    %515 = vmatpush1.msra.mxu0 0.0
    %516 = vmatprep.subr.mxu0 0.0
    %517 = vmatpush1.msra.mxu0 0.0
    %518 = vmatprep.subr.mxu0 0.0
    %519 = vmatpush1.msra.mxu0 0.0
    %520 = vmatprep.subr.mxu0 0.0
    %521 = vmatpush1.msra.mxu0 0.0
    %522 = vmatprep.subr.mxu0 0.0
    %523 = vmatpush1.msra.mxu0 0.0
    %524 = vmatprep.mubr.f32.mxu0 0.0
    %525 = vmatmul.mubr.f32.gmra.mrb[0].mxu0 %v458
    %v526 = vpop.f32.mrb[0].mxu0
    %v527 = vadd.f32 0.0, %v526
    %v528 = vpop.f32.mrb[0].mxu0
    %529 = vdwg.mxu0
    %v531 = vsel %vm129, %v123, 0
    %533 = vmatprep.subr.mxu0 0.0
    %534 = vmatpush1.msra.mxu0 %v449
    %535 = vmatprep.subr.mxu0 0.0
    %536 = vmatpush1.msra.mxu0 %v450
    %537 = vmatprep.subr.mxu0 0.0
    %538 = vmatpush1.msra.mxu0 %v451
    %539 = vmatprep.subr.mxu0 0.0
    %540 = vmatpush1.msra.mxu0 %v452
    %541 = vmatprep.subr.mxu0 0.0
    %542 = vmatpush1.msra.mxu0 0.0
    %543 = vmatprep.subr.mxu0 0.0
    %544 = vmatpush1.msra.mxu0 0.0
    %545 = vmatprep.subr.mxu0 0.0
    %546 = vmatpush1.msra.mxu0 0.0
    %547 = vmatprep.subr.mxu0 0.0
    %548 = vmatpush1.msra.mxu0 0.0
    %549 = vmatprep.subr.mxu0 0.0
    %550 = vmatpush1.msra.mxu0 0.0
    %551 = vmatprep.subr.mxu0 0.0
    %552 = vmatpush1.msra.mxu0 0.0
    %553 = vmatprep.subr.mxu0 0.0
    %554 = vmatpush1.msra.mxu0 0.0
    %555 = vmatprep.subr.mxu0 0.0
    %556 = vmatpush1.msra.mxu0 0.0
    %557 = vmatprep.subr.mxu0 0.0
    %558 = vmatpush1.msra.mxu0 0.0
    %559 = vmatprep.subr.mxu0 0.0
    %560 = vmatpush1.msra.mxu0 0.0
    %561 = vmatprep.subr.mxu0 0.0
    %562 = vmatpush1.msra.mxu0 0.0
    %563 = vmatprep.subr.mxu0 0.0
    %564 = vmatpush1.msra.mxu0 0.0
    %565 = vmatprep.subr.mxu0 0.0
    %566 = vmatpush1.msra.mxu0 0.0
    %567 = vmatprep.subr.mxu0 0.0
    %568 = vmatpush1.msra.mxu0 0.0
    %569 = vmatprep.subr.mxu0 0.0
    %570 = vmatpush1.msra.mxu0 0.0
    %571 = vmatprep.subr.mxu0 0.0
    %572 = vmatpush1.msra.mxu0 0.0
    %573 = vmatprep.subr.mxu0 0.0
    %574 = vmatpush1.msra.mxu0 0.0
    %575 = vmatprep.subr.mxu0 0.0
    %576 = vmatpush1.msra.mxu0 0.0
    %577 = vmatprep.subr.mxu0 0.0
    %578 = vmatpush1.msra.mxu0 0.0
    %579 = vmatprep.subr.mxu0 0.0
    %580 = vmatpush1.msra.mxu0 0.0
    %581 = vmatprep.subr.mxu0 0.0
    %582 = vmatpush1.msra.mxu0 0.0
    %583 = vmatprep.subr.mxu0 0.0
    %584 = vmatpush1.msra.mxu0 0.0
    %585 = vmatprep.subr.mxu0 0.0
    %586 = vmatpush1.msra.mxu0 0.0
    %587 = vmatprep.subr.mxu0 0.0
    %588 = vmatpush1.msra.mxu0 0.0
    %589 = vmatprep.subr.mxu0 0.0
    %590 = vmatpush1.msra.mxu0 0.0
    %591 = vmatprep.subr.mxu0 0.0
    %592 = vmatpush1.msra.mxu0 0.0
    %593 = vmatprep.subr.mxu0 0.0
    %594 = vmatpush1.msra.mxu0 0.0
    %595 = vmatprep.subr.mxu0 0.0
    %596 = vmatpush1.msra.mxu0 0.0
    %597 = vmatprep.mubr.f32.mxu0 0.0
    %598 = vmatmul.mubr.f32.gmra.mrb[0].mxu0 %v531
    %v599 = vpop.f32.mrb[0].mxu0
    %v600 = vadd.f32 %v527, %v599
    %v601 = vpop.f32.mrb[0].mxu0
    %602 = vdwg.mxu0
    %v603 = vld [vmem:[#allocation11] sm:$0xff]
    %v604 = vld [vmem:[#allocation11 + $0x8] sm:$0xff]
    %v605 = vld [vmem:[#allocation11 + $0x10] sm:$0xff]
    %v606 = vld [vmem:[#allocation11 + $0x18] sm:$0xff]
    %607 = vmatprep.subr.mxu0 0.0
    %608 = vmatpush1.msra.mxu0 %v603
    %609 = vmatprep.subr.mxu0 0.0
    %610 = vmatpush1.msra.mxu0 %v604
    %611 = vmatprep.subr.mxu0 0.0
    %612 = vmatpush1.msra.mxu0 %v605
    %613 = vmatprep.subr.mxu0 0.0
    %614 = vmatpush1.msra.mxu0 %v606
    %615 = vmatprep.subr.mxu0 0.0
    %616 = vmatpush1.msra.mxu0 0.0
    %617 = vmatprep.subr.mxu0 0.0
    %618 = vmatpush1.msra.mxu0 0.0
    %619 = vmatprep.subr.mxu0 0.0
    %620 = vmatpush1.msra.mxu0 0.0
    %621 = vmatprep.subr.mxu0 0.0
    %622 = vmatpush1.msra.mxu0 0.0
    %623 = vmatprep.subr.mxu0 0.0
    %624 = vmatpush1.msra.mxu0 0.0
    %625 = vmatprep.subr.mxu0 0.0
    %626 = vmatpush1.msra.mxu0 0.0
    %627 = vmatprep.subr.mxu0 0.0
    %628 = vmatpush1.msra.mxu0 0.0
    %629 = vmatprep.subr.mxu0 0.0
    %630 = vmatpush1.msra.mxu0 0.0
    %631 = vmatprep.subr.mxu0 0.0
    %632 = vmatpush1.msra.mxu0 0.0
    %633 = vmatprep.subr.mxu0 0.0
    %634 = vmatpush1.msra.mxu0 0.0
    %635 = vmatprep.subr.mxu0 0.0
    %636 = vmatpush1.msra.mxu0 0.0
    %637 = vmatprep.subr.mxu0 0.0
    %638 = vmatpush1.msra.mxu0 0.0
    %639 = vmatprep.subr.mxu0 0.0
    %640 = vmatpush1.msra.mxu0 0.0
    %641 = vmatprep.subr.mxu0 0.0
    %642 = vmatpush1.msra.mxu0 0.0
    %643 = vmatprep.subr.mxu0 0.0
    %644 = vmatpush1.msra.mxu0 0.0
    %645 = vmatprep.subr.mxu0 0.0
    %646 = vmatpush1.msra.mxu0 0.0
    %647 = vmatprep.subr.mxu0 0.0
    %648 = vmatpush1.msra.mxu0 0.0
    %649 = vmatprep.subr.mxu0 0.0
    %650 = vmatpush1.msra.mxu0 0.0
    %651 = vmatprep.subr.mxu0 0.0
    %652 = vmatpush1.msra.mxu0 0.0
    %653 = vmatprep.subr.mxu0 0.0
    %654 = vmatpush1.msra.mxu0 0.0
    %655 = vmatprep.subr.mxu0 0.0
    %656 = vmatpush1.msra.mxu0 0.0
    %657 = vmatprep.subr.mxu0 0.0
    %658 = vmatpush1.msra.mxu0 0.0
    %659 = vmatprep.subr.mxu0 0.0
    %660 = vmatpush1.msra.mxu0 0.0
    %661 = vmatprep.subr.mxu0 0.0
    %662 = vmatpush1.msra.mxu0 0.0
    %663 = vmatprep.subr.mxu0 0.0
    %664 = vmatpush1.msra.mxu0 0.0
    %665 = vmatprep.subr.mxu0 0.0
    %666 = vmatpush1.msra.mxu0 0.0
    %667 = vmatprep.subr.mxu0 0.0
    %668 = vmatpush1.msra.mxu0 0.0
    %669 = vmatprep.subr.mxu0 0.0
    %670 = vmatpush1.msra.mxu0 0.0
    %671 = vmatprep.mubr.f32.mxu0 0.0
    %672 = vmatmul.mubr.f32.gmra.mrb[0].mxu0 %v131
    %v673 = vpop.f32.mrb[0].mxu0
    %v674 = vadd.f32 0.0, %v673
    %v675 = vpop.f32.mrb[0].mxu0
    %676 = vdwg.mxu0
    %v677 = vadd.f32 %v600, %v674
    %v678 = vld [vmem:[%s11] sm:$0x1]
    %v679 = vadd.f32 %v677, %v678
    %v680 = vxor.u32 %v679, 2147483648
    %v681 = vmul.f32 %v680, 1.442695
    %v682 = vpow.pop %v681
    %v683 = vadd.f32 %v682, 1.0
    %v684 = vrcp.pop %v683
    %v685 = vmul.f32 1.0, %v684
    %v686 = vtanh.pop %v679
    %v688 = vlaneseq
    %v689 = vshrl.u32 %v688, 7
    %v690 = vsub.s32 0, %v689
    %v691 = vrot.slane %v122, %v690
    %692 = vrot.lane.b32.xlu0 %v691, 32
    %v693 = vpop.permute.xlu0 %692
    %v695 = vmul.f32 %v685, %v693
    %697 = vrot.lane.b32.xlu0 %v686, 64
    %v698 = vpop.permute.xlu0 %697
    %v700 = vmul.f32 %v685, %v698
    %702 = vrot.lane.b32.xlu0 %v700, 32
    %v703 = vpop.permute.xlu0 %702
    %v705 = vadd.f32 %v695, %v703
    %v706 = vtanh.pop %v705
    %708 = vrot.lane.b32.xlu0 %v706, 64
    %v709 = vpop.permute.xlu0 %708
    %v711 = vmul.f32 %v685, %v709
    %713 = vrot.lane.b32.xlu0 %v711, 32
    %v714 = vpop.permute.xlu0 %713
    %vm716 = vcmask 253952
    %717 = vst.msk [vmem:[#allocation2] sm:$0x1] %vm716, %v714
    %719 = vrot.lane.b32.xlu0 %v705, 96
    %v720 = vpop.permute.xlu0 %719
    %722 = vst.msk [vmem:[#allocation3] sm:$0x1] %vm716, %v720
    %v723 = vld [vmem:[#allocation12] sm:$0xff]
    %v724 = vld [vmem:[#allocation12 + $0x8] sm:$0xff]
    %v725 = vld [vmem:[#allocation12 + $0x10] sm:$0xff]
    %v726 = vld [vmem:[#allocation12 + $0x18] sm:$0xff]
    %v727 = vld [vmem:[%s13] sm:$0x1]
    %v728 = vsel %vm129, %v714, 0
    %730 = vmatprep.subr.mxu0 0.0
    %731 = vmatpush1.msra.mxu0 %v723
    %732 = vmatprep.subr.mxu0 0.0
    %733 = vmatpush1.msra.mxu0 %v724
    %734 = vmatprep.subr.mxu0 0.0
    %735 = vmatpush1.msra.mxu0 %v725
    %736 = vmatprep.subr.mxu0 0.0
    %737 = vmatpush1.msra.mxu0 %v726
    %738 = vmatprep.subr.mxu0 0.0
    %739 = vmatpush1.msra.mxu0 0.0
    %740 = vmatprep.subr.mxu0 0.0
    %741 = vmatpush1.msra.mxu0 0.0
    %742 = vmatprep.subr.mxu0 0.0
    %743 = vmatpush1.msra.mxu0 0.0
    %744 = vmatprep.subr.mxu0 0.0
    %745 = vmatpush1.msra.mxu0 0.0
    %746 = vmatprep.subr.mxu0 0.0
    %747 = vmatpush1.msra.mxu0 0.0
    %748 = vmatprep.subr.mxu0 0.0
    %749 = vmatpush1.msra.mxu0 0.0
    %750 = vmatprep.subr.mxu0 0.0
    %751 = vmatpush1.msra.mxu0 0.0
    %752 = vmatprep.subr.mxu0 0.0
    %753 = vmatpush1.msra.mxu0 0.0
    %754 = vmatprep.subr.mxu0 0.0
    %755 = vmatpush1.msra.mxu0 0.0
    %756 = vmatprep.subr.mxu0 0.0
    %757 = vmatpush1.msra.mxu0 0.0
    %758 = vmatprep.subr.mxu0 0.0
    %759 = vmatpush1.msra.mxu0 0.0
    %760 = vmatprep.subr.mxu0 0.0
    %761 = vmatpush1.msra.mxu0 0.0
    %762 = vmatprep.subr.mxu0 0.0
    %763 = vmatpush1.msra.mxu0 0.0
    %764 = vmatprep.subr.mxu0 0.0
    %765 = vmatpush1.msra.mxu0 0.0
    %766 = vmatprep.subr.mxu0 0.0
    %767 = vmatpush1.msra.mxu0 0.0
    %768 = vmatprep.subr.mxu0 0.0
    %769 = vmatpush1.msra.mxu0 0.0
    %770 = vmatprep.subr.mxu0 0.0
    %771 = vmatpush1.msra.mxu0 0.0
    %772 = vmatprep.subr.mxu0 0.0
    %773 = vmatpush1.msra.mxu0 0.0
    %774 = vmatprep.subr.mxu0 0.0
    %775 = vmatpush1.msra.mxu0 0.0
    %776 = vmatprep.subr.mxu0 0.0
    %777 = vmatpush1.msra.mxu0 0.0
    %778 = vmatprep.subr.mxu0 0.0
    %779 = vmatpush1.msra.mxu0 0.0
    %780 = vmatprep.subr.mxu0 0.0
    %781 = vmatpush1.msra.mxu0 0.0
    %782 = vmatprep.subr.mxu0 0.0
    %783 = vmatpush1.msra.mxu0 0.0
    %784 = vmatprep.subr.mxu0 0.0
    %785 = vmatpush1.msra.mxu0 0.0
    %786 = vmatprep.subr.mxu0 0.0
    %787 = vmatpush1.msra.mxu0 0.0
    %788 = vmatprep.subr.mxu0 0.0
    %789 = vmatpush1.msra.mxu0 0.0
    %790 = vmatprep.subr.mxu0 0.0
    %791 = vmatpush1.msra.mxu0 0.0
    %792 = vmatprep.subr.mxu0 0.0
    %793 = vmatpush1.msra.mxu0 0.0
    %794 = vmatprep.mubr.f32.mxu0 0.0
    %795 = vmatmul.mubr.f32.gmra.mrb[0].mxu0 %v728
    %v796 = vpop.f32.mrb[0].mxu0
    %v797 = vadd.f32 %v727, %v796
    %v798 = vpop.f32.mrb[0].mxu0
    %799 = vdwg.mxu0
    %vm800 = vcmask 516096
    %v801 = vsel %vm800, %v797, -inf
    %802 = vmax.xlane.f32.xlu0 %v801
    %v803 = vpop.xlane.xlu0 %802
    %v804 = vsub.f32 %v797, %v803
    %v805 = vmul.f32 %v804, 1.442695
    %v806 = vpow.pop %v805
    %v807 = vsel %vm800, %v806, 0.0
    %808 = vadd.xlane.f32.xlu0 %v807
    %v809 = vpop.xlane.xlu0 %808
    %v810 = vlog2.pop %v809
    %v811 = vmul.f32 %v810, 0.6931472
    %v812 = vsub.f32 %v804, %v811
    %v813 = vlaneseq
    %vm814 = vcmp.ge.s32.totalorder %v813, 0
    %vm815 = vcmp.lt.s32.totalorder %v813, 256
    %vm816 = vmand %vm814, %vm815
    %817 = vst.msk [vmem:[#allocation14] sm:$0x3] %vm816, 0.0
    %vm818 = vcmp.lt.s32.totalorder %v813, 64
    %vm819 = vmand %vm814, %vm818
    %820 = vst.msk [vmem:[#allocation14] sm:$0x1] %vm819, %v812
    %v822 = vunpack.c.l.s4 1966171168
    %v823 = vunpack.c.0.s8 %v822
    %v824 = vlaneseq
    %v825 = vshrl.u32 %v824, 7
    %v826 = vsub.s32 %v823, %v825
    %v827 = vrot.slane %v711, %v826
    %v829 = vunpack.c.l.s4 1966171168
    %v830 = vunpack.c.0.s8 %v829
    %v831 = vlaneseq
    %v832 = vshrl.u32 %v831, 7
    %v833 = vsub.s32 %v830, %v832
    %v834 = vrot.slane %v827, %v833
    %835 = vrot.lane.b32.xlu0 %v834, 96
    %v836 = vpop.permute.xlu0 %835
    %vm838 = vcmp.ge.s32.totalorder %v813, 64
    %vm839 = vcmp.lt.s32.totalorder %v813, 96
    %vm840 = vmand %vm838, %vm839
    %841 = vst.msk [vmem:[#allocation14] sm:$0x1] %vm840, %v836
    %v843 = vunpack.c.l.s4 1966171168
    %v844 = vunpack.c.0.s8 %v843
    %v845 = vlaneseq
    %v846 = vshrl.u32 %v845, 7
    %v847 = vsub.s32 %v844, %v846
    %v848 = vrot.slane %v705, %v847
    %v850 = vunpack.c.l.s4 1966171168
    %v851 = vunpack.c.0.s8 %v850
    %v852 = vlaneseq
    %v853 = vshrl.u32 %v852, 7
    %v854 = vsub.s32 %v851, %v853
    %v855 = vrot.slane %v848, %v854
    %856 = vrot.lane.b32.xlu0 %v855, 64
    %v857 = vpop.permute.xlu0 %856
    %vm859 = vcmp.ge.s32.totalorder %v813, 96
    %vm860 = vcmp.lt.s32.totalorder %v813, 128
    %vm861 = vmand %vm859, %vm860
    %862 = vst.msk [vmem:[#allocation14] sm:$0x1] %vm861, %v857
    %vm863 = vcmp.lt.s32.totalorder %v813, 8
    %vm864 = vmand %vm814, %vm863
    %865 = vst.msk [vmem:[#allocation14 + $0x1] sm:$0x1] %vm864, %v374
    // Predicated region
    $region74: #{tpu_custom_call.1} parent=1 // pred_check
      _
    $region75: #{tpu_custom_call.1} parent=1 // pred_check_branch
      %867 = sbr.rel (0) target = $region77
    $region76: #{tpu_custom_call.1} parent=1 // pred_region
      %s869 = ssub.s32 32, 32
      %870 = vsyncadd [#allocation8], %s869
      %s872 = sshll.u32 [#allocation14], 4
      %s873 = int_to_ptr.vmem [resolvable:$true] %s872
      %875 = dma.vmem_to_hbm [thread:$0]  %s873, 32, %s14, [#allocation8]
    $region77: #{tpu_custom_call.1} parent=1 // pred_fallthru
      _
    // Predicated region
    $region78: #{tpu_custom_call.1} parent=1 // pred_check
      _
    $region79: #{tpu_custom_call.1} parent=1 // pred_check_branch
      %877 = sbr.rel (0) target = $region81
    $region80: #{tpu_custom_call.1} parent=1 // pred_region
      %878 = dma.done [#allocation8], 32
    $region81: #{tpu_custom_call.1} parent=1 // pred_fallthru
      _
    %879 = vsyncpa [#allocation7], 1
    %880 = vsyncpa [#allocation10], 1
    %881 = vsyncpa [#allocation13], 1
    %882 = vsyncpa [#allocation8], 1

</llo_original>
